<compile_context>
chip_gen: v7x
topology: tpu7x:2x2x1
jax: 0.10.0
libtpu: 0.0.40
codegen_flags: <defaults>
</compile_context>

<pallas_src>
import functools

import jax
import jax.numpy as jnp
from jax.experimental import pallas as pl
from jax.experimental.pallas import tpu as pltpu


def _focal_loss_kernel(x_ref, t_ref, psum_ref, *, gamma: float, total_n: int,
                       tile_n: int):
    i = pl.program_id(0)

    x = x_ref[...].astype(jnp.float32)          # (TILE_N, C) logits (bf16 upcast free)
    t = t_ref[...]                              # (TILE_N, 1) int32 targets
    tn, c = x.shape

    # Rows past the true batch size (padded partial last tile) hold garbage; zero
    # them so every intermediate stays finite, and drop them from the partial sum.
    row = jax.lax.broadcasted_iota(jnp.int32, (tn, 1), 0) + i * tile_n   # (TILE_N, 1)
    valid = row < total_n                                                # (TILE_N, 1)
    x = jnp.where(valid, x, 0.0)

    # Numerically-stable log_softmax along the class (lane) axis.
    m = jnp.max(x, axis=1, keepdims=True)                                # (TILE_N, 1)
    z = x - m
    lse = jnp.log(jnp.sum(jnp.exp(z), axis=1, keepdims=True)) + m        # (TILE_N, 1)

    # Gather log p_t via a one-hot mask (no dynamic per-lane gather on TPU vregs).
    cls_idx = jax.lax.broadcasted_iota(jnp.int32, (tn, c), 1)            # (TILE_N, C)
    onehot = (cls_idx == t).astype(jnp.float32)
    logpt = jnp.sum(onehot * x, axis=1, keepdims=True) - lse             # (TILE_N, 1)

    nll = -logpt                                                         # per-sample NLL
    pt = jnp.exp(logpt)
    d = jnp.maximum(1.0 - pt, 0.0)              # clamp: pt may round slightly above 1
    if gamma == 2.0:                            # default path: pure VPU, no pow lowering
        focal = d * d
    elif gamma == 1.0:
        focal = d
    elif gamma == 0.0:
        focal = jnp.ones_like(d)
    else:
        focal = d ** jnp.float32(gamma)

    f_loss = jnp.where(valid, focal * nll, 0.0)                          # (TILE_N, 1)

    # Lane-dense (1, 8, 128) partial-sum block per grid step: unmasked stores, and
    # each step owns its own output block so the grid axis stays "parallel".
    psum_ref[...] = jnp.broadcast_to(jnp.sum(f_loss), psum_ref.shape).astype(jnp.float32)


def _choose_tile_n(n: int, c: int, itemsize: int) -> int:
    """Pick a batch-tile size whose logits block is ~4 MiB (safe on every chip)."""
    if n < 8:
        return n                       # full-extent block (block dim == array dim)
    budget = 4 * 1024 * 1024           # bytes per logits tile; 2x when double-buffered
    tile = budget // max(c * itemsize, 1)
    tile = max(8, min(1024, (tile // 8) * 8))
    return min(tile, (n // 8) * 8)     # keep the block inside the array (last tile may
                                       # still be partial; masked in-kernel)


def focal_loss(inputs, targets, gamma: float = 2.0):
    """Pallas TPU FocalLoss forward (label_smoothing=0, weight=None, reduction='mean')."""
    n, c = inputs.shape
    # NOTE: the (N, 1) int32 target block is lane-padded in VMEM (128x useful bytes);
    # acceptable at moderate/large C per the perf review, kept for simplicity.
    t = targets.astype(jnp.int32).reshape(n, 1)

    tile_n = _choose_tile_n(n, c, inputs.dtype.itemsize)
    num_tiles = pl.cdiv(n, tile_n)

    partials = pl.pallas_call(
        functools.partial(_focal_loss_kernel, gamma=float(gamma), total_n=n,
                          tile_n=tile_n),
        out_shape=jax.ShapeDtypeStruct((num_tiles, 8, 128), jnp.float32),
        grid_spec=pltpu.PrefetchScalarGridSpec(
            num_scalar_prefetch=0,
            grid=(num_tiles,),
            in_specs=[
                pl.BlockSpec((tile_n, c), lambda i: (i, 0)),
                pl.BlockSpec((tile_n, 1), lambda i: (i, 0)),
            ],
            out_specs=pl.BlockSpec((1, 8, 128), lambda i: (i, 0, 0)),
        ),
        compiler_params=pltpu.CompilerParams(
            dimension_semantics=("parallel",),
            vmem_limit_bytes=32 * 1024 * 1024,
        ),
    )(inputs, t)

    # reduction == 'mean': tiny finalize outside the kernel (divide by true N once).
    return jnp.sum(partials[:, 0, 0]) / jnp.float32(n)


def _reference_focal_loss(logits, targets, gamma=2.0):
    logp = jax.nn.log_softmax(logits.astype(jnp.float32), axis=1)
    logpt = jnp.take_along_axis(logp, targets[:, None], axis=1)[:, 0]
    return jnp.mean(((1.0 - jnp.exp(logpt)) ** gamma) * (-logpt))


if __name__ == "__main__":
    key = jax.random.PRNGKey(0)
    k1, k2, k3, k4 = jax.random.split(key, 4)

    # Small shapes consistent with the module's forward: (batch, num_classes) logits.
    N, C = 8, 16
    logits = jax.random.normal(k1, (N, C), dtype=jnp.float32)
    targets = jax.random.randint(k2, (N,), 0, C, dtype=jnp.int32)

    loss = focal_loss(logits, targets, gamma=2.0)
    jax.block_until_ready(loss)
    ref = _reference_focal_loss(logits, targets, gamma=2.0)
    assert jnp.allclose(loss, ref, rtol=1e-5, atol=1e-6), (loss, ref)

    # Exercise the tiled / partial-last-tile (masked) path: N not a multiple of TILE_N.
    N2, C2 = 20, 16
    logits2 = jax.random.normal(k3, (N2, C2), dtype=jnp.float32)
    targets2 = jax.random.randint(k4, (N2,), 0, C2, dtype=jnp.int32)

    loss2 = focal_loss(logits2, targets2, gamma=2.0)
    jax.block_until_ready(loss2)
    ref2 = _reference_focal_loss(logits2, targets2, gamma=2.0)
    assert jnp.allclose(loss2, ref2, rtol=1e-5, atol=1e-6), (loss2, ref2)

    print("KERNEL_OK")
</pallas_src>

<mosaic_0001>
module attributes {stable_mosaic.version = 11 : i64} {
  func.func @_focal_loss_kernel(%arg0: i32, %arg1: memref<8x16xf32, #tpu.memory_space<vmem>>, %arg2: memref<8x1xi32, #tpu.memory_space<vmem>>, %arg3: memref<1x8x128xf32, #tpu.memory_space<vmem>>) attributes {dimension_semantics = [#tpu.dimension_semantics<parallel>], iteration_bounds = array<i64: 1>, scalar_prefetch = 0 : i64, scratch_operands = 0 : i64, tpu.core_type = #tpu.core_type<tc>, window_params = [{transform_indices = @transform_0, window_bounds = array<i64: 8, 16>}, {transform_indices = @transform_1, window_bounds = array<i64: 8, 1>}, {transform_indices = @transform_2, window_bounds = array<i64: 1, 8, 128>}]} {
    %c0 = arith.constant 0 : index
    %c0_0 = arith.constant 0 : index
    %0 = vector.load %arg1[%c0, %c0_0] : memref<8x16xf32, #tpu.memory_space<vmem>>, vector<8x16xf32>
    %c0_1 = arith.constant 0 : index
    %c0_2 = arith.constant 0 : index
    %1 = vector.load %arg2[%c0_1, %c0_2] : memref<8x1xi32, #tpu.memory_space<vmem>>, vector<8x1xi32>
    %2 = tpu.iota {dimensions = array<i32: 0>} : vector<8x1xi32>
    %c8_i32 = arith.constant 8 : i32
    %3 = arith.muli %arg0, %c8_i32 : i32
    %4 = vector.broadcast %3 : i32 to vector<8x1xi32>
    %5 = arith.addi %2, %4 : vector<8x1xi32>
    %c8_i32_3 = arith.constant 8 : i32
    %6 = vector.broadcast %c8_i32_3 : i32 to vector<8x1xi32>
    %7 = arith.cmpi slt, %5, %6 : vector<8x1xi32>
    %cst = arith.constant 0.000000e+00 : f32
    %8 = vector.shape_cast %7 : vector<8x1xi1> to vector<8x1xi1>
    %9 = vector.broadcast %8 : vector<8x1xi1> to vector<8x16xi1>
    %10 = vector.broadcast %cst : f32 to vector<8x16xf32>
    %11 = arith.select %9, %0, %10 : vector<8x16xi1>, vector<8x16xf32>
    %cst_4 = arith.constant dense<0xFF800000> : vector<8xf32>
    %12 = vector.multi_reduction <maximumf>, %11, %cst_4 [1] : vector<8x16xf32> to vector<8xf32>
    %13 = vector.shape_cast %12 : vector<8xf32> to vector<8x1xf32>
    %14 = vector.broadcast %13 : vector<8x1xf32> to vector<8x16xf32>
    %15 = arith.subf %11, %14 : vector<8x16xf32>
    %16 = math.exp %15 : vector<8x16xf32>
    %cst_5 = arith.constant dense<0.000000e+00> : vector<8xf32>
    %17 = vector.multi_reduction <add>, %16, %cst_5 [1] : vector<8x16xf32> to vector<8xf32>
    %18 = vector.shape_cast %17 : vector<8xf32> to vector<8x1xf32>
    %19 = math.log %18 : vector<8x1xf32>
    %20 = arith.addf %19, %13 : vector<8x1xf32>
    %21 = tpu.iota {dimensions = array<i32: 1>} : vector<8x16xi32>
    %22 = vector.broadcast %1 : vector<8x1xi32> to vector<8x16xi32>
    %23 = arith.cmpi eq, %21, %22 : vector<8x16xi32>
    %24 = arith.extui %23 : vector<8x16xi1> to vector<8x16xi32>
    %25 = arith.sitofp %24 : vector<8x16xi32> to vector<8x16xf32>
    %26 = arith.mulf %25, %11 : vector<8x16xf32>
    %cst_6 = arith.constant dense<0.000000e+00> : vector<8xf32>
    %27 = vector.multi_reduction <add>, %26, %cst_6 [1] : vector<8x16xf32> to vector<8xf32>
    %28 = vector.shape_cast %27 : vector<8xf32> to vector<8x1xf32>
    %29 = arith.subf %28, %20 : vector<8x1xf32>
    %cst_7 = arith.constant 0.000000e+00 : f32
    %30 = vector.broadcast %cst_7 : f32 to vector<8x1xf32>
    %31 = arith.subf %30, %29 : vector<8x1xf32>
    %32 = math.exp %29 : vector<8x1xf32>
    %cst_8 = arith.constant 1.000000e+00 : f32
    %33 = vector.broadcast %cst_8 : f32 to vector<8x1xf32>
    %34 = arith.subf %33, %32 : vector<8x1xf32>
    %cst_9 = arith.constant 0.000000e+00 : f32
    %35 = vector.broadcast %cst_9 : f32 to vector<8x1xf32>
    %36 = arith.maximumf %34, %35 : vector<8x1xf32>
    %37 = arith.mulf %36, %36 : vector<8x1xf32>
    %38 = arith.mulf %37, %31 : vector<8x1xf32>
    %cst_10 = arith.constant 0.000000e+00 : f32
    %39 = vector.broadcast %cst_10 : f32 to vector<8x1xf32>
    %40 = arith.select %7, %38, %39 : vector<8x1xi1>, vector<8x1xf32>
    %41 = vector.shape_cast %40 : vector<8x1xf32> to vector<1x8x1xf32>
    %cst_11 = arith.constant dense<0.000000e+00> : vector<1xf32>
    %42 = vector.multi_reduction <add>, %41, %cst_11 [1, 2] : vector<1x8x1xf32> to vector<1xf32>
    %43 = vector.shape_cast %42 : vector<1xf32> to vector<1x1x1xf32>
    %44 = vector.extract %43[0, 0, 0] : f32 from vector<1x1x1xf32>
    %45 = vector.broadcast %44 : f32 to vector<1x8x128xf32>
    %c0_12 = arith.constant 0 : index
    %c0_13 = arith.constant 0 : index
    %c0_14 = arith.constant 0 : index
    %46 = vector.load %arg3[%c0_12, %c0_13, %c0_14] : memref<1x8x128xf32, #tpu.memory_space<vmem>>, vector<1x8x128xf32>
    tpu.vector_store %arg3[%c0_12, %c0_13, %c0_14], %45 {strides = array<i32>} : memref<1x8x128xf32, #tpu.memory_space<vmem>>, vector<1x8x128xf32>,
    return
  }
  func.func @transform_0(%arg0: i32) -> (i32, i32) {
    %c0_i32 = arith.constant 0 : i32
    %c0_i32_0 = arith.constant 0 : i32
    return %arg0, %c0_i32 : i32, i32
  }
  func.func @transform_1(%arg0: i32) -> (i32, i32) {
    %c0_i32 = arith.constant 0 : i32
    %c0_i32_0 = arith.constant 0 : i32
    return %arg0, %c0_i32 : i32, i32
  }
  func.func @transform_2(%arg0: i32) -> (i32, i32, i32) {
    %c0_i32 = arith.constant 0 : i32
    %c0_i32_0 = arith.constant 0 : i32
    %c0_i32_1 = arith.constant 0 : i32
    return %arg0, %c0_i32, %c0_i32_0 : i32, i32, i32
  }
}

</mosaic_0001>

<llo_original>
// kernel: tpu_custom_call.1
$region0: #{tpu_custom_call.1}
  #allocation0 [shape = 'u32[]', space=smem, size = 0x4, offset = 0x4, fixed_abs, tag = 'smem constant byte address 0x4 - core index']
  #allocation1 [shape = 'u32[144,128]{1,0:T(1,128)}', space=vmem, size = 0x12000, scoped, tag = 'internal scratch']
  %s0 = inlined_call_operand.vmem [shape: f32[8,16], index: 0, kind: input, shape index: {}]
  %s1 = inlined_call_operand.vmem [shape: s32[8,1], index: 1, kind: input, shape index: {}]
  %s2 = inlined_call_operand.hbm [shape: f32[1,8,128], index: 2, kind: output, shape index: {}]
  %s3 = sld [smem:[#allocation0]]
  $region18: #{tpu_custom_call.1} parent=0
    _
  %s5 = ssub.s32 1, %s3
  %s6 = scalar_select 0, %s5, %s3
  $region1: #{tpu_custom_call.1} parent=0
    #allocation2 [shape = 'u8[4096]{0}', space=vmem, size = 0x1000, scoped, tag = 'output window, operand 0, single buffered']
    #allocation3 [shape = 's32[1]{0}', space=sflag, size = 0x4, scoped, tag = 'scoped memory for tpu_custom_call.1']
    %7 = vsyncpa [#allocation3], 0
    // Predicated region
    $region2: #{tpu_custom_call.1} parent=1 // pred_check
      _
    $region3: #{tpu_custom_call.1} parent=1 // pred_check_branch
      %9 = sbr.rel (0) target = $region5
    $region4: #{tpu_custom_call.1} parent=1 // pred_region
      _
    $region5: #{tpu_custom_call.1} parent=1 // pred_fallthru
      _
    // Predicated region
    $region6: #{tpu_custom_call.1} parent=1 // pred_check
      _
    $region7: #{tpu_custom_call.1} parent=1 // pred_check_branch
      %11 = sbr.rel (0) target = $region9
    $region8: #{tpu_custom_call.1} parent=1 // pred_region
      _
    $region9: #{tpu_custom_call.1} parent=1 // pred_fallthru
      _
    %v12 = vld [vmem:[%s0] sm:$0xff]
    %v13 = vld [vmem:[%s1] sm:$0xff]
    %v14 = vlaneseq
    %v15 = vshrl.u32 %v14, 7
    %s16 = smul.u32 0, 8
    %v17 = vstv %s16
    %v18 = vadd.s32 %v15, %v17
    %vm19 = vcmp.lt.s32.totalorder %v18, 8
    %v20 = vsel %vm19, 1, 0
    %vm21 = vcmp.eq.s32.totalorder %v20, 1
    %v22 = vsel %vm21, %v12, 0.0
    %vm23 = vcmask 130048
    %v24 = vsel %vm23, %v22, -inf
    %25 = vmax.xlane.f32.xlu0 %v24
    %v26 = vpop.xlane.xlu0 %25
    %v27 = vsub.f32 %v22, %v26
    %v28 = vmul.f32 %v27, 1.442695
    %v29 = vpow.pop %v28
    %v30 = vsel %vm23, %v29, 0.0
    %31 = vadd.xlane.f32.xlu0 %v30
    %v32 = vpop.xlane.xlu0 %31
    %v33 = vlog2.pop %v32
    %v34 = vmul.f32 %v33, 0.6931472
    %v35 = vadd.f32 %v34, %v26
    %v36 = vlaneseq
    %v37 = vand.u32 %v36, 127
    %38 = vset.pattern.permute.xlu0 0
    %39 = vperm.xlu0 %38, %v13
    %v40 = vpop.permute.xlu0 %39
    %vm41 = vcmp.eq.s32.totalorder %v37, %v40
    %v42 = vsel %vm41, 1, 0
    %v43 = vcvt.s32.f32 %v42
    %v44 = vmul.f32 %v43, %v22
    %v45 = vsel %vm23, %v44, 0.0
    %46 = vadd.xlane.f32.xlu0 %v45
    %v47 = vpop.xlane.xlu0 %46
    %v48 = vsub.f32 %v47, %v35
    %v49 = vsub.f32 0.0, %v48
    %v50 = vmul.f32 %v48, 1.442695
    %v51 = vpow.pop %v50
    %v52 = vsub.f32 1.0, %v51
    %v53 = vmax.f32 %v52, 0.0
    %v54 = vmul.f32 %v53, %v53
    %v55 = vmul.f32 %v54, %v49
    %v56 = vsel %vm19, %v55, 0.0
    %vm57 = vcmask 7168
    %v58 = vsel %vm57, %v56, 0.0
    %59 = vadd.xlane.f32.xlu0 %v58
    %v60 = vpop.xlane.xlu0 %59
    %v61 = vrot.slane %v60, 4
    %v62 = vadd.f32 %v60, %v61
    %v63 = vrot.slane %v62, 2
    %v64 = vadd.f32 %v62, %v63
    %v65 = vrot.slane %v64, 1
    %v66 = vadd.f32 %v64, %v65
    %s67 = vtos %v66
    %v68 = vstv %s67
    %69 = vst [vmem:[#allocation2] sm:$0xff] %v68
    // Predicated region
    $region10: #{tpu_custom_call.1} parent=1 // pred_check
      _
    $region11: #{tpu_custom_call.1} parent=1 // pred_check_branch
      %71 = sbr.rel (0) target = $region13
    $region12: #{tpu_custom_call.1} parent=1 // pred_region
      %s73 = ssub.s32 128, 128
      %74 = vsyncadd [#allocation3], %s73
      %s76 = sshll.u32 [#allocation2], 4
      %s77 = int_to_ptr.vmem [resolvable:$true] %s76
      %79 = dma.vmem_to_hbm [thread:$0]  %s77, 128, %s2, [#allocation3]
    $region13: #{tpu_custom_call.1} parent=1 // pred_fallthru
      _
    // Predicated region
    $region14: #{tpu_custom_call.1} parent=1 // pred_check
      _
    $region15: #{tpu_custom_call.1} parent=1 // pred_check_branch
      %81 = sbr.rel (0) target = $region17
    $region16: #{tpu_custom_call.1} parent=1 // pred_region
      %82 = dma.done [#allocation3], 128
    $region17: #{tpu_custom_call.1} parent=1 // pred_fallthru
      _
    %83 = vsyncpa [#allocation3], 1

</llo_original>
